<compile_context>
chip_gen: v7x
topology: tpu7x:2x2x1
jax: 0.10.0
libtpu: 0.0.40
codegen_flags: <defaults>
</compile_context>

<pallas_src>
import functools

import jax
import jax.numpy as jnp
import numpy as np
from jax.experimental import pallas as pl
from jax.experimental.pallas import tpu as pltpu

INPUT_SIZE = 128
HIDDEN_LAYERS = [64, 64]
SCALE = 1.729
SHIFT = -5.837

MAX_TILE_N = 2048          # atoms per grid step (x block = 1 MiB f32) -> per-step DMA >> fixed overhead
ONEHOT_ELEM_CAP = 1 << 18  # bound n_struct * tile_n one-hot working set (~1 MiB f32)


def _silu(v):
    return v * jax.nn.sigmoid(v)


# ---------------------------------------------------------------------------
# One fused kernel: per-atom MLP / MLPw, gated weighting, segment sum into the
# resident (n_struct,128) output, and (on the last grid step) the mean + readout.
# ---------------------------------------------------------------------------
def fused_kernel(batch_ref, x_ref,
                 wf_ref, bf_ref,          # fused first layer   (128,128)/(1,128)
                 ws_ref, bs_ref,          # fused second layer  (128,128)/(1,128)
                 w3_ref, b3_ref,          # MLP out layer, K padded to 128 -> (128,128)/(1,128)
                 invd_ref,                # 1/(count+1)          (n_struct,1)
                 wr1_ref, br1_ref, wr2_ref, br2_ref,   # readout (scale/shift folded into wr2/br2)
                 pred_ref, stct_ref,      # outputs: (n_struct,1), (n_struct,128) resident
                 *, n_atoms, hdim):
    t = pl.program_id(0)
    tile_n = x_ref.shape[0]
    n_struct = stct_ref.shape[0]

    @pl.when(t == 0)
    def _():
        stct_ref[...] = jnp.zeros_like(stct_ref)
        pred_ref[...] = jnp.zeros_like(pred_ref)

    x = x_ref[...].astype(jnp.bfloat16)

    # --- fused first layer [MLP.l1 | MLPw.l1]: one 128-lane matmul + one SiLU ---
    z1 = jnp.dot(x, wf_ref[...], preferred_element_type=jnp.float32) + bf_ref[...]
    z1 = z1 * jax.nn.sigmoid(z1)                                   # SiLU, lane-dense (tile_n,128)

    # --- fused block-diag second layer [w2 | wb]: lane-dense z*sigmoid(z); the gate
    #     column sits at lane `hdim`, lanes > hdim are dead and killed by w3_pad's zero rows ---
    z2 = jnp.dot(z1.astype(jnp.bfloat16), ws_ref[...],
                 preferred_element_type=jnp.float32) + bs_ref[...]
    sig2 = jax.nn.sigmoid(z2)
    h2 = z2 * sig2                                                 # (tile_n,128) lane-dense
    w_gate = sig2[:, hdim:hdim + 1]                                # sigmoid gate (tile_n,1)

    # --- MLP output layer (K zero-padded 64->128) + gating ---
    fx = jnp.dot(h2.astype(jnp.bfloat16), w3_ref[...],
                 preferred_element_type=jnp.float32) + b3_ref[...]
    weighted = w_gate * fx                                         # (tile_n,128)

    if n_atoms % tile_n != 0:
        # Ragged last tile: rows past n_atoms hold undefined data (possibly NaN/Inf and
        # garbage batch ids).  Zero them so the one-hot matmul cannot be poisoned.
        row = t * tile_n + jax.lax.broadcasted_iota(jnp.int32, (tile_n, 1), 0)
        weighted = jnp.where(row < n_atoms, weighted, 0.0)

    # --- segment sum via one-hot matmul into the resident output accumulator ---
    seg = batch_ref[...]                                           # (1, tile_n) int32
    rows = jax.lax.broadcasted_iota(jnp.int32, (n_struct, tile_n), 0)
    onehot = (rows == seg).astype(jnp.bfloat16)                    # exact in bf16
    stct_ref[...] += jnp.dot(onehot, weighted.astype(jnp.bfloat16),
                             preferred_element_type=jnp.float32)

    # --- fused epilogue on the last grid step: mean + tiny readout MLP ---
    @pl.when(t == pl.num_programs(0) - 1)
    def _():
        stct = stct_ref[...] * invd_ref[...]   # torch scatter_reduce_ 'mean' (include_self on zeros)
        stct_ref[...] = stct
        hr = jnp.dot(stct, wr1_ref[...], preferred_element_type=jnp.float32) + br1_ref[...]
        pred_ref[...] = jnp.dot(hr, wr2_ref[...],
                                preferred_element_type=jnp.float32) + br2_ref[...]


def intrinsic_readout(x, batch, params, n_struct, *, max_tile_n=MAX_TILE_N):
    n_atoms, feat = x.shape
    hdim = HIDDEN_LAYERS[0]
    assert feat == INPUT_SIZE and 2 * hdim == feat

    w1, b1, w2, b2, w3, b3 = params["mlp"]
    wa, ba, wb, bb = params["mlpw"]
    wr1, br1, wr2, br2 = params["readout"]
    scale = params["scale"][0, 0]
    shift = params["shift"][0, 0]

    # ---- host-side (tiny) weight fusion -------------------------------------------------
    w_first = jnp.concatenate([w1, wa], axis=1).astype(jnp.bfloat16)          # (128,128)
    b_first = jnp.concatenate([b1, ba], axis=1)                               # (1,128) f32
    w_second = (jnp.zeros((feat, feat), jnp.float32)
                .at[:hdim, :hdim].set(w2)
                .at[hdim:, hdim:hdim + 1].set(wb)).astype(jnp.bfloat16)       # (128,128)
    b_second = (jnp.zeros((1, feat), jnp.float32)
                .at[:, :hdim].set(b2)
                .at[:, hdim:hdim + 1].set(bb))                                # (1,128) f32
    w3_pad = (jnp.zeros((feat, feat), jnp.float32)
              .at[:hdim, :].set(w3)).astype(jnp.bfloat16)                     # (128,128), rows>=64 zero
    # Fold scale/shift into the last readout layer: (h@wr2 + br2)*s + t == h@(wr2*s) + (br2*s + t)
    wr2s = wr2 * scale
    br2s = br2 * scale + shift

    counts = jax.ops.segment_sum(jnp.ones((n_atoms,), jnp.float32),
                                 batch.astype(jnp.int32), num_segments=n_struct)
    inv_denom = (1.0 / (counts + 1.0)).reshape(n_struct, 1)                   # (B,1) f32

    batch2 = batch.astype(jnp.int32).reshape(1, n_atoms)

    # ---- tile size: amortize the ~0.35 us per-step overhead, bounded by the one-hot set.
    #      x is streamed unpadded; a ragged final tile is masked in-kernel.
    cap = int(min(max_tile_n, max(256, ONEHOT_ELEM_CAP // max(1, n_struct))))
    if n_atoms <= cap:
        tile_n = n_atoms                       # single (or exact) block, no raggedness
    else:
        tile_n = max(128, (cap // 128) * 128)  # multiple of 128 -> satisfies lane constraint
    num_tiles = int(pl.cdiv(n_atoms, tile_n))

    def const_spec(shape):
        return pl.BlockSpec(shape, lambda t, _n=len(shape): (0,) * _n)

    flops = n_atoms * (2 * 3 * feat * feat + 2 * n_struct * feat)
    bytes_acc = (n_atoms * (feat * 4 + 4) + 3 * feat * feat * 2
                 + feat * hdim * 4 + n_struct * (feat + 2) * 4)
    cost = pl.CostEstimate(flops=int(flops), transcendentals=int(2 * feat * n_atoms),
                           bytes_accessed=int(bytes_acc))

    kern = functools.partial(fused_kernel, n_atoms=n_atoms, hdim=hdim)
    pred, stct = pl.pallas_call(
        kern,
        out_shape=(jax.ShapeDtypeStruct((n_struct, 1), jnp.float32),
                   jax.ShapeDtypeStruct((n_struct, feat), jnp.float32)),
        grid=(num_tiles,),
        in_specs=[
            pl.BlockSpec((1, tile_n), lambda t: (0, t)),        # batch ids (streamed)
            pl.BlockSpec((tile_n, feat), lambda t: (t, 0)),     # x (streamed, double-buffered)
            const_spec(w_first.shape), const_spec(b_first.shape),
            const_spec(w_second.shape), const_spec(b_second.shape),
            const_spec(w3_pad.shape), const_spec(b3.shape),
            const_spec(inv_denom.shape),
            const_spec(wr1.shape), const_spec(br1.shape),
            const_spec(wr2s.shape), const_spec(br2s.shape),
        ],
        out_specs=(pl.BlockSpec((n_struct, 1), lambda t: (0, 0)),
                   pl.BlockSpec((n_struct, feat), lambda t: (0, 0))),
        compiler_params=pltpu.CompilerParams(
            dimension_semantics=("arbitrary",),
            vmem_limit_bytes=48 * 1024 * 1024),
        cost_estimate=cost,
    )(batch2, x, w_first, b_first, w_second, b_second, w3_pad, b3,
      inv_denom, wr1, br1, wr2s, br2s)
    return pred[:, 0], stct


def make_params(key):
    def lin(k, n_in, n_out, s=0.1):
        kw, kb = jax.random.split(k)
        w = jax.random.normal(kw, (n_in, n_out), jnp.float32) * s
        b = jax.random.normal(kb, (1, n_out), jnp.float32) * s
        return w, b

    ks = jax.random.split(key, 8)
    w1, b1 = lin(ks[0], INPUT_SIZE, HIDDEN_LAYERS[0])
    w2, b2 = lin(ks[1], HIDDEN_LAYERS[0], HIDDEN_LAYERS[1])
    w3, b3 = lin(ks[2], HIDDEN_LAYERS[1], INPUT_SIZE)
    wa, ba = lin(ks[3], INPUT_SIZE, HIDDEN_LAYERS[0])
    wb, bb = lin(ks[4], HIDDEN_LAYERS[0], 1)
    wr1, br1 = lin(ks[5], INPUT_SIZE, INPUT_SIZE // 2)
    wr2, br2 = lin(ks[6], INPUT_SIZE // 2, 1)
    return {
        "mlp": (w1, b1, w2, b2, w3, b3),
        "mlpw": (wa, ba, wb, bb),
        "readout": (wr1, br1, wr2, br2),
        "scale": jnp.full((1, 1), SCALE, jnp.float32),
        "shift": jnp.full((1, 1), SHIFT, jnp.float32),
    }


def reference(x, batch, params, n_struct):
    w1, b1, w2, b2, w3, b3 = params["mlp"]
    wa, ba, wb, bb = params["mlpw"]
    wr1, br1, wr2, br2 = params["readout"]
    h = _silu(x @ w1 + b1)
    h = _silu(h @ w2 + b2)
    fx = h @ w3 + b3
    hw = _silu(x @ wa + ba)
    w = jax.nn.sigmoid(hw @ wb + bb)
    weighted = w * fx
    sums = jax.ops.segment_sum(weighted, batch, num_segments=n_struct)
    counts = jax.ops.segment_sum(jnp.ones((x.shape[0],), jnp.float32), batch,
                                 num_segments=n_struct)
    stct = sums / (counts[:, None] + 1.0)   # torch scatter_reduce_ 'mean', include_self=True
    pred = (stct @ wr1 + br1) @ wr2 + br2
    pred = pred * params["scale"][0, 0] + params["shift"][0, 0]
    return pred[:, 0], stct


if __name__ == "__main__":
    key = jax.random.PRNGKey(0)
    kx, kp, kx2, kb2 = jax.random.split(key, 4)
    params = make_params(kp)

    # --- test 1: tiny, single exact tile ---
    n_atoms, n_struct = 32, 4
    x = jax.random.normal(kx, (n_atoms, INPUT_SIZE), jnp.float32)
    batch = jnp.array([0] * 8 + [1] * 10 + [2] * 6 + [3] * 8, dtype=jnp.int32)

    pred, stct = intrinsic_readout(x, batch, params, n_struct)
    jax.block_until_ready((pred, stct))
    pred_ref, stct_ref = reference(x, batch, params, n_struct)
    assert pred.shape == (n_struct,) and stct.shape == (n_struct, INPUT_SIZE)
    # bf16 MXU inputs (f32 accumulation) -> loosened tolerance vs the f32 reference.
    np.testing.assert_allclose(np.asarray(stct), np.asarray(stct_ref), rtol=2e-2, atol=2e-2)
    np.testing.assert_allclose(np.asarray(pred), np.asarray(pred_ref), rtol=2e-2, atol=2e-2)

    # --- test 2: multi-tile with a ragged last block (exercises the in-kernel mask) ---
    n_atoms2, n_struct2 = 300, 5
    x2 = jax.random.normal(kx2, (n_atoms2, INPUT_SIZE), jnp.float32)
    batch2 = jax.random.randint(kb2, (n_atoms2,), 0, n_struct2, dtype=jnp.int32)

    pred2, stct2 = intrinsic_readout(x2, batch2, params, n_struct2, max_tile_n=128)
    jax.block_until_ready((pred2, stct2))
    pred2_ref, stct2_ref = reference(x2, batch2, params, n_struct2)
    np.testing.assert_allclose(np.asarray(stct2), np.asarray(stct2_ref), rtol=2e-2, atol=2e-2)
    np.testing.assert_allclose(np.asarray(pred2), np.asarray(pred2_ref), rtol=2e-2, atol=2e-2)

    print("KERNEL_OK")
</pallas_src>

<mosaic_0001>
module attributes {stable_mosaic.version = 11 : i64} {
  func.func @fused_kernel(%arg0: i32, %arg1: memref<1x32xi32, #tpu.memory_space<vmem>>, %arg2: memref<32x128xf32, #tpu.memory_space<vmem>>, %arg3: memref<128x128xbf16, #tpu.memory_space<vmem>>, %arg4: memref<1x128xf32, #tpu.memory_space<vmem>>, %arg5: memref<128x128xbf16, #tpu.memory_space<vmem>>, %arg6: memref<1x128xf32, #tpu.memory_space<vmem>>, %arg7: memref<128x128xbf16, #tpu.memory_space<vmem>>, %arg8: memref<1x128xf32, #tpu.memory_space<vmem>>, %arg9: memref<4x1xf32, #tpu.memory_space<vmem>>, %arg10: memref<128x64xf32, #tpu.memory_space<vmem>>, %arg11: memref<1x64xf32, #tpu.memory_space<vmem>>, %arg12: memref<64x1xf32, #tpu.memory_space<vmem>>, %arg13: memref<1x1xf32, #tpu.memory_space<vmem>>, %arg14: memref<4x1xf32, #tpu.memory_space<vmem>>, %arg15: memref<4x128xf32, #tpu.memory_space<vmem>>) attributes {dimension_semantics = [#tpu.dimension_semantics<arbitrary>], iteration_bounds = array<i64: 1>, scalar_prefetch = 0 : i64, scratch_operands = 0 : i64, tpu.core_type = #tpu.core_type<tc>, window_params = [{transform_indices = @transform_0, window_bounds = array<i64: 1, 32>}, {transform_indices = @transform_1, window_bounds = array<i64: 32, 128>}, {pipeline_mode = #tpu.pipeline_mode<synchronous>, transform_indices = @transform_2, window_bounds = array<i64: 128, 128>}, {pipeline_mode = #tpu.pipeline_mode<synchronous>, transform_indices = @transform_3, window_bounds = array<i64: 1, 128>}, {pipeline_mode = #tpu.pipeline_mode<synchronous>, transform_indices = @transform_4, window_bounds = array<i64: 128, 128>}, {pipeline_mode = #tpu.pipeline_mode<synchronous>, transform_indices = @transform_5, window_bounds = array<i64: 1, 128>}, {pipeline_mode = #tpu.pipeline_mode<synchronous>, transform_indices = @transform_6, window_bounds = array<i64: 128, 128>}, {pipeline_mode = #tpu.pipeline_mode<synchronous>, transform_indices = @transform_7, window_bounds = array<i64: 1, 128>}, {pipeline_mode = #tpu.pipeline_mode<synchronous>, transform_indices = @transform_8, window_bounds = array<i64: 4, 1>}, {pipeline_mode = #tpu.pipeline_mode<synchronous>, transform_indices = @transform_9, window_bounds = array<i64: 128, 64>}, {pipeline_mode = #tpu.pipeline_mode<synchronous>, transform_indices = @transform_10, window_bounds = array<i64: 1, 64>}, {pipeline_mode = #tpu.pipeline_mode<synchronous>, transform_indices = @transform_11, window_bounds = array<i64: 64, 1>}, {pipeline_mode = #tpu.pipeline_mode<synchronous>, transform_indices = @transform_12, window_bounds = array<i64: 1, 1>}, {pipeline_mode = #tpu.pipeline_mode<synchronous>, transform_indices = @transform_13, window_bounds = array<i64: 4, 1>}, {pipeline_mode = #tpu.pipeline_mode<synchronous>, transform_indices = @transform_14, window_bounds = array<i64: 4, 128>}]} {
    %c0_i32 = arith.constant 0 : i32
    %0 = arith.cmpi eq, %arg0, %c0_i32 : i32
    %1 = arith.extui %0 : i1 to i32
    %c0_i32_0 = arith.constant 0 : i32
    %2 = arith.cmpi ne, %1, %c0_i32_0 : i32
    scf.if %2 {
      %cst_27 = arith.constant 0.000000e+00 : f32
      %52 = vector.broadcast %cst_27 : f32 to vector<4x128xf32>
      %c0_28 = arith.constant 0 : index
      %c0_29 = arith.constant 0 : index
      %53 = vector.load %arg15[%c0_28, %c0_29] : memref<4x128xf32, #tpu.memory_space<vmem>>, vector<4x128xf32>
      tpu.vector_store %arg15[%c0_28, %c0_29], %52 {strides = array<i32>} : memref<4x128xf32, #tpu.memory_space<vmem>>, vector<4x128xf32>,
      %cst_30 = arith.constant 0.000000e+00 : f32
      %54 = vector.broadcast %cst_30 : f32 to vector<4x1xf32>
      %c0_31 = arith.constant 0 : index
      %c0_32 = arith.constant 0 : index
      %55 = vector.load %arg14[%c0_31, %c0_32] : memref<4x1xf32, #tpu.memory_space<vmem>>, vector<4x1xf32>
      tpu.vector_store %arg14[%c0_31, %c0_32], %54 {strides = array<i32>} : memref<4x1xf32, #tpu.memory_space<vmem>>, vector<4x1xf32>,
    } else {
    }
    %c0 = arith.constant 0 : index
    %c0_1 = arith.constant 0 : index
    %3 = vector.load %arg2[%c0, %c0_1] : memref<32x128xf32, #tpu.memory_space<vmem>>, vector<32x128xf32>
    %4 = arith.truncf %3 : vector<32x128xf32> to vector<32x128xbf16>
    %c0_2 = arith.constant 0 : index
    %c0_3 = arith.constant 0 : index
    %5 = vector.load %arg3[%c0_2, %c0_3] : memref<128x128xbf16, #tpu.memory_space<vmem>>, vector<128x128xbf16>
    %cst = arith.constant dense<0.000000e+00> : vector<32x128xf32>
    %6 = tpu.matmul %4, %5, %cst {dimension_numbers = #tpu.dot_dimension_numbers<[1], [0], [0], [1], [0, 0, 1, 1], [], []>} : vector<32x128xbf16>, vector<128x128xbf16>, vector<32x128xf32> -> vector<32x128xf32>
    %c0_4 = arith.constant 0 : index
    %c0_5 = arith.constant 0 : index
    %7 = vector.load %arg4[%c0_4, %c0_5] : memref<1x128xf32, #tpu.memory_space<vmem>>, vector<1x128xf32>
    %8 = vector.broadcast %7 : vector<1x128xf32> to vector<32x128xf32>
    %9 = arith.addf %6, %8 : vector<32x128xf32>
    %10 = arith.negf %9 : vector<32x128xf32>
    %11 = math.exp %10 : vector<32x128xf32>
    %cst_6 = arith.constant 1.000000e+00 : f32
    %12 = vector.broadcast %cst_6 : f32 to vector<32x128xf32>
    %13 = arith.addf %12, %11 : vector<32x128xf32>
    %14 = arith.divf %12, %13 : vector<32x128xf32>
    %15 = arith.mulf %9, %14 : vector<32x128xf32>
    %16 = arith.truncf %15 : vector<32x128xf32> to vector<32x128xbf16>
    %c0_7 = arith.constant 0 : index
    %c0_8 = arith.constant 0 : index
    %17 = vector.load %arg5[%c0_7, %c0_8] : memref<128x128xbf16, #tpu.memory_space<vmem>>, vector<128x128xbf16>
    %cst_9 = arith.constant dense<0.000000e+00> : vector<32x128xf32>
    %18 = tpu.matmul %16, %17, %cst_9 {dimension_numbers = #tpu.dot_dimension_numbers<[1], [0], [0], [1], [0, 0, 1, 1], [], []>} : vector<32x128xbf16>, vector<128x128xbf16>, vector<32x128xf32> -> vector<32x128xf32>
    %c0_10 = arith.constant 0 : index
    %c0_11 = arith.constant 0 : index
    %19 = vector.load %arg6[%c0_10, %c0_11] : memref<1x128xf32, #tpu.memory_space<vmem>>, vector<1x128xf32>
    %20 = vector.broadcast %19 : vector<1x128xf32> to vector<32x128xf32>
    %21 = arith.addf %18, %20 : vector<32x128xf32>
    %22 = arith.negf %21 : vector<32x128xf32>
    %23 = math.exp %22 : vector<32x128xf32>
    %cst_12 = arith.constant 1.000000e+00 : f32
    %24 = vector.broadcast %cst_12 : f32 to vector<32x128xf32>
    %25 = arith.addf %24, %23 : vector<32x128xf32>
    %26 = arith.divf %24, %25 : vector<32x128xf32>
    %27 = arith.mulf %21, %26 : vector<32x128xf32>
    %28 = vector.extract_strided_slice %26 {offsets = [0, 64], sizes = [32, 1], strides = [1, 1]} : vector<32x128xf32> to vector<32x1xf32>
    %29 = arith.truncf %27 : vector<32x128xf32> to vector<32x128xbf16>
    %c0_13 = arith.constant 0 : index
    %c0_14 = arith.constant 0 : index
    %30 = vector.load %arg7[%c0_13, %c0_14] : memref<128x128xbf16, #tpu.memory_space<vmem>>, vector<128x128xbf16>
    %cst_15 = arith.constant dense<0.000000e+00> : vector<32x128xf32>
    %31 = tpu.matmul %29, %30, %cst_15 {dimension_numbers = #tpu.dot_dimension_numbers<[1], [0], [0], [1], [0, 0, 1, 1], [], []>} : vector<32x128xbf16>, vector<128x128xbf16>, vector<32x128xf32> -> vector<32x128xf32>
    %c0_16 = arith.constant 0 : index
    %c0_17 = arith.constant 0 : index
    %32 = vector.load %arg8[%c0_16, %c0_17] : memref<1x128xf32, #tpu.memory_space<vmem>>, vector<1x128xf32>
    %33 = vector.broadcast %32 : vector<1x128xf32> to vector<32x128xf32>
    %34 = arith.addf %31, %33 : vector<32x128xf32>
    %35 = vector.broadcast %28 : vector<32x1xf32> to vector<32x128xf32>
    %36 = arith.mulf %35, %34 : vector<32x128xf32>
    %c0_18 = arith.constant 0 : index
    %c0_19 = arith.constant 0 : index
    %37 = vector.load %arg1[%c0_18, %c0_19] : memref<1x32xi32, #tpu.memory_space<vmem>>, vector<1x32xi32>
    %38 = tpu.iota {dimensions = array<i32: 0>} : vector<4x32xi32>
    %39 = vector.broadcast %37 : vector<1x32xi32> to vector<4x32xi32>
    %40 = arith.cmpi eq, %38, %39 : vector<4x32xi32>
    %41 = arith.extui %40 : vector<4x32xi1> to vector<4x32xi32>
    %42 = arith.sitofp %41 : vector<4x32xi32> to vector<4x32xf32>
    %43 = arith.truncf %42 : vector<4x32xf32> to vector<4x32xbf16>
    %c0_20 = arith.constant 0 : index
    %c0_21 = arith.constant 0 : index
    %44 = vector.load %arg15[%c0_20, %c0_21] : memref<4x128xf32, #tpu.memory_space<vmem>>, vector<4x128xf32>
    %45 = arith.truncf %36 : vector<32x128xf32> to vector<32x128xbf16>
    %cst_22 = arith.constant dense<0.000000e+00> : vector<4x128xf32>
    %46 = tpu.matmul %43, %45, %cst_22 {dimension_numbers = #tpu.dot_dimension_numbers<[1], [0], [0], [1], [0, 0, 1, 1], [], []>} : vector<4x32xbf16>, vector<32x128xbf16>, vector<4x128xf32> -> vector<4x128xf32>
    %47 = arith.addf %44, %46 : vector<4x128xf32>
    %c0_23 = arith.constant 0 : index
    %c0_24 = arith.constant 0 : index
    %48 = vector.load %arg15[%c0_23, %c0_24] : memref<4x128xf32, #tpu.memory_space<vmem>>, vector<4x128xf32>
    tpu.vector_store %arg15[%c0_23, %c0_24], %47 {strides = array<i32>} : memref<4x128xf32, #tpu.memory_space<vmem>>, vector<4x128xf32>,
    %c0_i32_25 = arith.constant 0 : i32
    %49 = arith.cmpi eq, %arg0, %c0_i32_25 : i32
    %50 = arith.extui %49 : i1 to i32
    %c0_i32_26 = arith.constant 0 : i32
    %51 = arith.cmpi ne, %50, %c0_i32_26 : i32
    scf.if %51 {
      %c0_27 = arith.constant 0 : index
      %c0_28 = arith.constant 0 : index
      %52 = vector.load %arg15[%c0_27, %c0_28] : memref<4x128xf32, #tpu.memory_space<vmem>>, vector<4x128xf32>
      %c0_29 = arith.constant 0 : index
      %c0_30 = arith.constant 0 : index
      %53 = vector.load %arg9[%c0_29, %c0_30] : memref<4x1xf32, #tpu.memory_space<vmem>>, vector<4x1xf32>
      %54 = vector.broadcast %53 : vector<4x1xf32> to vector<4x128xf32>
      %55 = arith.mulf %52, %54 : vector<4x128xf32>
      %c0_31 = arith.constant 0 : index
      %c0_32 = arith.constant 0 : index
      %56 = vector.load %arg15[%c0_31, %c0_32] : memref<4x128xf32, #tpu.memory_space<vmem>>, vector<4x128xf32>
      tpu.vector_store %arg15[%c0_31, %c0_32], %55 {strides = array<i32>} : memref<4x128xf32, #tpu.memory_space<vmem>>, vector<4x128xf32>,
      %c0_33 = arith.constant 0 : index
      %c0_34 = arith.constant 0 : index
      %57 = vector.load %arg10[%c0_33, %c0_34] : memref<128x64xf32, #tpu.memory_space<vmem>>, vector<128x64xf32>
      %cst_35 = arith.constant dense<0.000000e+00> : vector<4x64xf32>
      %58 = tpu.matmul %55, %57, %cst_35 {dimension_numbers = #tpu.dot_dimension_numbers<[1], [0], [0], [1], [0, 0, 1, 1], [], []>} : vector<4x128xf32>, vector<128x64xf32>, vector<4x64xf32> -> vector<4x64xf32>
      %c0_36 = arith.constant 0 : index
      %c0_37 = arith.constant 0 : index
      %59 = vector.load %arg11[%c0_36, %c0_37] : memref<1x64xf32, #tpu.memory_space<vmem>>, vector<1x64xf32>
      %60 = vector.broadcast %59 : vector<1x64xf32> to vector<4x64xf32>
      %61 = arith.addf %58, %60 : vector<4x64xf32>
      %c0_38 = arith.constant 0 : index
      %c0_39 = arith.constant 0 : index
      %62 = vector.load %arg12[%c0_38, %c0_39] : memref<64x1xf32, #tpu.memory_space<vmem>>, vector<64x1xf32>
      %cst_40 = arith.constant dense<0.000000e+00> : vector<4x1xf32>
      %63 = tpu.matmul %61, %62, %cst_40 {dimension_numbers = #tpu.dot_dimension_numbers<[1], [0], [0], [1], [0, 0, 1, 1], [], []>} : vector<4x64xf32>, vector<64x1xf32>, vector<4x1xf32> -> vector<4x1xf32>
      %c0_41 = arith.constant 0 : index
      %c0_42 = arith.constant 0 : index
      %64 = vector.load %arg13[%c0_41, %c0_42] : memref<1x1xf32, #tpu.memory_space<vmem>>, vector<1x1xf32>
      %65 = vector.broadcast %64 : vector<1x1xf32> to vector<4x1xf32>
      %66 = arith.addf %63, %65 : vector<4x1xf32>
      %c0_43 = arith.constant 0 : index
      %c0_44 = arith.constant 0 : index
      %67 = vector.load %arg14[%c0_43, %c0_44] : memref<4x1xf32, #tpu.memory_space<vmem>>, vector<4x1xf32>
      tpu.vector_store %arg14[%c0_43, %c0_44], %66 {strides = array<i32>} : memref<4x1xf32, #tpu.memory_space<vmem>>, vector<4x1xf32>,
    } else {
    }
    return
  }
  func.func @transform_0(%arg0: i32) -> (i32, i32) {
    %c0_i32 = arith.constant 0 : i32
    %c0_i32_0 = arith.constant 0 : i32
    return %c0_i32, %arg0 : i32, i32
  }
  func.func @transform_1(%arg0: i32) -> (i32, i32) {
    %c0_i32 = arith.constant 0 : i32
    %c0_i32_0 = arith.constant 0 : i32
    return %arg0, %c0_i32 : i32, i32
  }
  func.func @transform_2(%arg0: i32) -> (i32, i32) {
    %c0_i32 = arith.constant 0 : i32
    %c0_i32_0 = arith.constant 0 : i32
    %c0_i32_1 = arith.constant 0 : i32
    return %c0_i32, %c0_i32_0 : i32, i32
  }
  func.func @transform_3(%arg0: i32) -> (i32, i32) {
    %c0_i32 = arith.constant 0 : i32
    %c0_i32_0 = arith.constant 0 : i32
    %c0_i32_1 = arith.constant 0 : i32
    return %c0_i32, %c0_i32_0 : i32, i32
  }
  func.func @transform_4(%arg0: i32) -> (i32, i32) {
    %c0_i32 = arith.constant 0 : i32
    %c0_i32_0 = arith.constant 0 : i32
    %c0_i32_1 = arith.constant 0 : i32
    return %c0_i32, %c0_i32_0 : i32, i32
  }
  func.func @transform_5(%arg0: i32) -> (i32, i32) {
    %c0_i32 = arith.constant 0 : i32
    %c0_i32_0 = arith.constant 0 : i32
    %c0_i32_1 = arith.constant 0 : i32
    return %c0_i32, %c0_i32_0 : i32, i32
  }
  func.func @transform_6(%arg0: i32) -> (i32, i32) {
    %c0_i32 = arith.constant 0 : i32
    %c0_i32_0 = arith.constant 0 : i32
    %c0_i32_1 = arith.constant 0 : i32
    return %c0_i32, %c0_i32_0 : i32, i32
  }
  func.func @transform_7(%arg0: i32) -> (i32, i32) {
    %c0_i32 = arith.constant 0 : i32
    %c0_i32_0 = arith.constant 0 : i32
    %c0_i32_1 = arith.constant 0 : i32
    return %c0_i32, %c0_i32_0 : i32, i32
  }
  func.func @transform_8(%arg0: i32) -> (i32, i32) {
    %c0_i32 = arith.constant 0 : i32
    %c0_i32_0 = arith.constant 0 : i32
    %c0_i32_1 = arith.constant 0 : i32
    return %c0_i32, %c0_i32_0 : i32, i32
  }
  func.func @transform_9(%arg0: i32) -> (i32, i32) {
    %c0_i32 = arith.constant 0 : i32
    %c0_i32_0 = arith.constant 0 : i32
    %c0_i32_1 = arith.constant 0 : i32
    return %c0_i32, %c0_i32_0 : i32, i32
  }
  func.func @transform_10(%arg0: i32) -> (i32, i32) {
    %c0_i32 = arith.constant 0 : i32
    %c0_i32_0 = arith.constant 0 : i32
    %c0_i32_1 = arith.constant 0 : i32
    return %c0_i32, %c0_i32_0 : i32, i32
  }
  func.func @transform_11(%arg0: i32) -> (i32, i32) {
    %c0_i32 = arith.constant 0 : i32
    %c0_i32_0 = arith.constant 0 : i32
    %c0_i32_1 = arith.constant 0 : i32
    return %c0_i32, %c0_i32_0 : i32, i32
  }
  func.func @transform_12(%arg0: i32) -> (i32, i32) {
    %c0_i32 = arith.constant 0 : i32
    %c0_i32_0 = arith.constant 0 : i32
    %c0_i32_1 = arith.constant 0 : i32
    return %c0_i32, %c0_i32_0 : i32, i32
  }
  func.func @transform_13(%arg0: i32) -> (i32, i32) {
    %c0_i32 = arith.constant 0 : i32
    %c0_i32_0 = arith.constant 0 : i32
    %c0_i32_1 = arith.constant 0 : i32
    return %c0_i32, %c0_i32_0 : i32, i32
  }
  func.func @transform_14(%arg0: i32) -> (i32, i32) {
    %c0_i32 = arith.constant 0 : i32
    %c0_i32_0 = arith.constant 0 : i32
    %c0_i32_1 = arith.constant 0 : i32
    return %c0_i32, %c0_i32_0 : i32, i32
  }
}

</mosaic_0001>

<llo_original>
// kernel: tpu_custom_call.1
$region0: #{tpu_custom_call.1}
  #allocation0 [shape = 'u32[]', space=smem, size = 0x4, offset = 0x4, fixed_abs, tag = 'smem constant byte address 0x4 - core index']
  #allocation1 [shape = 'u32[144,128]{1,0:T(1,128)}', space=vmem, size = 0x12000, scoped, tag = 'internal scratch']
  #allocation2 [shape = 'f32[1,1]{1,0:T(1,128)S(1)}', space=vmem, size = 0x200, scoped, tag = 'scoped memory for tpu_custom_call.1']
  %s0 = inlined_call_operand.vmem [shape: s32[1,32], index: 0, kind: input, shape index: {}]
  %s1 = inlined_call_operand.vmem [shape: f32[32,128], index: 1, kind: input, shape index: {}]
  %s2 = inlined_call_operand.vmem [shape: bf16[128,128], index: 2, kind: input, shape index: {}]
  %s3 = inlined_call_operand.vmem [shape: f32[1,128], index: 3, kind: input, shape index: {}]
  %s4 = inlined_call_operand.vmem [shape: bf16[128,128], index: 4, kind: input, shape index: {}]
  %s5 = inlined_call_operand.vmem [shape: f32[1,128], index: 5, kind: input, shape index: {}]
  %s6 = inlined_call_operand.vmem [shape: bf16[128,128], index: 6, kind: input, shape index: {}]
  %s7 = inlined_call_operand.vmem [shape: f32[1,128], index: 7, kind: input, shape index: {}]
  %s8 = inlined_call_operand.vmem [shape: f32[4,1], index: 8, kind: input, shape index: {}]
  %s9 = inlined_call_operand.vmem [shape: f32[128,64], index: 9, kind: input, shape index: {}]
  %s10 = inlined_call_operand.vmem [shape: f32[1,64], index: 10, kind: input, shape index: {}]
  %s11 = inlined_call_operand.vmem [shape: f32[64,1], index: 11, kind: input, shape index: {}]
  %s12 = inlined_call_operand.<no memory space> [shape: f32[1,1], index: 12, kind: input, shape index: {}]
  %s13 = inlined_call_operand.vmem [shape: f32[4,1], index: 13, kind: output, shape index: {0}]
  %s14 = inlined_call_operand.hbm [shape: f32[4,128], index: 14, kind: output, shape index: {1}]
  %15 = xla_tuple %s13, %s14
  %s16 = sld [smem:[#allocation0]]
  $region78: #{tpu_custom_call.1} parent=0
    _
  %s18 = ssub.s32 1, %s16
  %s19 = scalar_select 0, %s18, %s16
  %v20 = vstv %s12
  %21 = vst [vmem:[#allocation2] sm:$0x1] %v20
  $region1: #{tpu_custom_call.1} parent=0
    #allocation3 [shape = 'u8[2048]{0}', space=vmem, size = 0x800, scoped, tag = 'output window, operand 1, single buffered']
    #allocation4 [shape = 's32[1]{0}', space=sflag, size = 0x4, scoped, tag = 'scoped memory for tpu_custom_call.1']
    %22 = vsyncpa [#allocation4], 0
    // Predicated region
    $region2: #{tpu_custom_call.1} parent=1 // pred_check
      _
    $region3: #{tpu_custom_call.1} parent=1 // pred_check_branch
      %24 = sbr.rel (0) target = $region5
    $region4: #{tpu_custom_call.1} parent=1 // pred_region
      _
    $region5: #{tpu_custom_call.1} parent=1 // pred_fallthru
      _
    // Predicated region
    $region6: #{tpu_custom_call.1} parent=1 // pred_check
      _
    $region7: #{tpu_custom_call.1} parent=1 // pred_check_branch
      %26 = sbr.rel (0) target = $region9
    $region8: #{tpu_custom_call.1} parent=1 // pred_region
      _
    $region9: #{tpu_custom_call.1} parent=1 // pred_fallthru
      _
    // Predicated region
    $region10: #{tpu_custom_call.1} parent=1 // pred_check
      _
    $region11: #{tpu_custom_call.1} parent=1 // pred_check_branch
      %28 = sbr.rel (0) target = $region13
    $region12: #{tpu_custom_call.1} parent=1 // pred_region
      _
    $region13: #{tpu_custom_call.1} parent=1 // pred_fallthru
      _
    // Predicated region
    $region14: #{tpu_custom_call.1} parent=1 // pred_check
      _
    $region15: #{tpu_custom_call.1} parent=1 // pred_check_branch
      %30 = sbr.rel (0) target = $region17
    $region16: #{tpu_custom_call.1} parent=1 // pred_region
      _
    $region17: #{tpu_custom_call.1} parent=1 // pred_fallthru
      _
    // Predicated region
    $region18: #{tpu_custom_call.1} parent=1 // pred_check
      _
    $region19: #{tpu_custom_call.1} parent=1 // pred_check_branch
      %32 = sbr.rel (0) target = $region21
    $region20: #{tpu_custom_call.1} parent=1 // pred_region
      _
    $region21: #{tpu_custom_call.1} parent=1 // pred_fallthru
      _
    // Predicated region
    $region22: #{tpu_custom_call.1} parent=1 // pred_check
      _
    $region23: #{tpu_custom_call.1} parent=1 // pred_check_branch
      %34 = sbr.rel (0) target = $region25
    $region24: #{tpu_custom_call.1} parent=1 // pred_region
      _
    $region25: #{tpu_custom_call.1} parent=1 // pred_fallthru
      _
    // Predicated region
    $region26: #{tpu_custom_call.1} parent=1 // pred_check
      _
    $region27: #{tpu_custom_call.1} parent=1 // pred_check_branch
      %36 = sbr.rel (0) target = $region29
    $region28: #{tpu_custom_call.1} parent=1 // pred_region
      _
    $region29: #{tpu_custom_call.1} parent=1 // pred_fallthru
      _
    // Predicated region
    $region30: #{tpu_custom_call.1} parent=1 // pred_check
      _
    $region31: #{tpu_custom_call.1} parent=1 // pred_check_branch
      %38 = sbr.rel (0) target = $region33
    $region32: #{tpu_custom_call.1} parent=1 // pred_region
      _
    $region33: #{tpu_custom_call.1} parent=1 // pred_fallthru
      _
    // Predicated region
    $region34: #{tpu_custom_call.1} parent=1 // pred_check
      _
    $region35: #{tpu_custom_call.1} parent=1 // pred_check_branch
      %40 = sbr.rel (0) target = $region37
    $region36: #{tpu_custom_call.1} parent=1 // pred_region
      _
    $region37: #{tpu_custom_call.1} parent=1 // pred_fallthru
      _
    // Predicated region
    $region38: #{tpu_custom_call.1} parent=1 // pred_check
      _
    $region39: #{tpu_custom_call.1} parent=1 // pred_check_branch
      %42 = sbr.rel (0) target = $region41
    $region40: #{tpu_custom_call.1} parent=1 // pred_region
      _
    $region41: #{tpu_custom_call.1} parent=1 // pred_fallthru
      _
    // Predicated region
    $region42: #{tpu_custom_call.1} parent=1 // pred_check
      _
    $region43: #{tpu_custom_call.1} parent=1 // pred_check_branch
      %44 = sbr.rel (0) target = $region45
    $region44: #{tpu_custom_call.1} parent=1 // pred_region
      _
    $region45: #{tpu_custom_call.1} parent=1 // pred_fallthru
      _
    // Predicated region
    $region46: #{tpu_custom_call.1} parent=1 // pred_check
      _
    $region47: #{tpu_custom_call.1} parent=1 // pred_check_branch
      %46 = sbr.rel (0) target = $region49
    $region48: #{tpu_custom_call.1} parent=1 // pred_region
      _
    $region49: #{tpu_custom_call.1} parent=1 // pred_fallthru
      _
    // Predicated region
    $region50: #{tpu_custom_call.1} parent=1 // pred_check
      _
    $region51: #{tpu_custom_call.1} parent=1 // pred_check_branch
      %48 = sbr.rel (0) target = $region53
    $region52: #{tpu_custom_call.1} parent=1 // pred_region
      _
    $region53: #{tpu_custom_call.1} parent=1 // pred_fallthru
      _
    %p50 = scmp.eq.s32.totalorder 0, 0
    // Predicated region
    $region54: #{tpu_custom_call.1} parent=1 // pred_check
      %p51 = pneg %p50
    $region55: #{tpu_custom_call.1} parent=1 // pred_check_branch
      %53 = sbr.rel (%p51) target = $region57
    $region56: #{tpu_custom_call.1} parent=1 // pred_region
      %54 = vst [vmem:[#allocation3] sm:$0xf] 0.0
      %vm55 = vcmask 3072
      %56 = vst.msk [vmem:[%s13] sm:$0xf] %vm55, 0.0
    $region57: #{tpu_custom_call.1} parent=1 // pred_fallthru
      _
    %v57 = vld [vmem:[%s1] sm:$0xff]
    %v58 = vld [vmem:[%s1 + $0x8] sm:$0xff]
    %v59 = vld [vmem:[%s1 + $0x10] sm:$0xff]
    %v60 = vld [vmem:[%s1 + $0x18] sm:$0xff]
    %v61 = vpack.c.bf16 %v58, %v57
    %v62 = vpack.c.bf16 %v60, %v59
    %v63 = vld [vmem:[%s2] sm:$0xf]
    %v64 = vld [vmem:[%s2 + $0x4] sm:$0xf]
    %v65 = vld [vmem:[%s2 + $0x8] sm:$0xf]
    %v66 = vld [vmem:[%s2 + $0xc] sm:$0xf]
    %v67 = vld [vmem:[%s2 + $0x10] sm:$0xf]
    %v68 = vld [vmem:[%s2 + $0x14] sm:$0xf]
    %v69 = vld [vmem:[%s2 + $0x18] sm:$0xf]
    %v70 = vld [vmem:[%s2 + $0x1c] sm:$0xf]
    %v71 = vld [vmem:[%s2 + $0x20] sm:$0xf]
    %v72 = vld [vmem:[%s2 + $0x24] sm:$0xf]
    %v73 = vld [vmem:[%s2 + $0x28] sm:$0xf]
    %v74 = vld [vmem:[%s2 + $0x2c] sm:$0xf]
    %v75 = vld [vmem:[%s2 + $0x30] sm:$0xf]
    %v76 = vld [vmem:[%s2 + $0x34] sm:$0xf]
    %v77 = vld [vmem:[%s2 + $0x38] sm:$0xf]
    %v78 = vld [vmem:[%s2 + $0x3c] sm:$0xf]
    %v79 = vld [vmem:[%s3] sm:$0x1]
    %v81 = vlaneseq
    %v82 = vshrl.u32 %v81, 7
    %v83 = vsub.s32 0, %v82
    %v84 = vrot.slane %v79, %v83
    %v102 = vunpack.c.l.b16 %v63
    %v103 = vunpack.c.l.b16 %v64
    %v104 = vunpack.c.l.b16 %v65
    %v105 = vunpack.c.l.b16 %v66
    %v106 = vunpack.c.l.b16 %v67
    %v107 = vunpack.c.l.b16 %v68
    %v108 = vunpack.c.l.b16 %v69
    %v109 = vunpack.c.l.b16 %v70
    %v110 = vunpack.c.l.b16 %v71
    %v111 = vunpack.c.l.b16 %v72
    %v112 = vunpack.c.l.b16 %v73
    %v113 = vunpack.c.l.b16 %v74
    %v114 = vunpack.c.l.b16 %v75
    %v115 = vunpack.c.l.b16 %v76
    %v116 = vunpack.c.l.b16 %v77
    %v117 = vunpack.c.l.b16 %v78
    %v118 = vpack.c.b16 %v103, %v102
    %v119 = vpack.c.b16 %v105, %v104
    %v120 = vpack.c.b16 %v107, %v106
    %v121 = vpack.c.b16 %v109, %v108
    %v122 = vpack.c.b16 %v111, %v110
    %v123 = vpack.c.b16 %v113, %v112
    %v124 = vpack.c.b16 %v115, %v114
    %v125 = vpack.c.b16 %v117, %v116
    %134 = vmatprep.subr.bf16.mxu0 0
    %135 = vmatpush1.bf16.msra.mxu0 %v118
    %136 = vmatprep.subr.bf16.mxu0 0
    %137 = vmatpush1.bf16.msra.mxu0 %v119
    %138 = vmatprep.subr.bf16.mxu0 0
    %139 = vmatpush1.bf16.msra.mxu0 %v120
    %140 = vmatprep.subr.bf16.mxu0 0
    %141 = vmatpush1.bf16.msra.mxu0 %v121
    %142 = vmatprep.subr.bf16.mxu0 0
    %143 = vmatpush1.bf16.msra.mxu0 %v122
    %144 = vmatprep.subr.bf16.mxu0 0
    %145 = vmatpush1.bf16.msra.mxu0 %v123
    %146 = vmatprep.subr.bf16.mxu0 0
    %147 = vmatpush1.bf16.msra.mxu0 %v124
    %148 = vmatprep.subr.bf16.mxu0 0
    %149 = vmatpush1.bf16.msra.mxu0 %v125
    %150 = vmatprep.subr.bf16.mxu0 0
    %151 = vmatpush1.bf16.msra.mxu0 0
    %152 = vmatprep.subr.bf16.mxu0 0
    %153 = vmatpush1.bf16.msra.mxu0 0
    %154 = vmatprep.subr.bf16.mxu0 0
    %155 = vmatpush1.bf16.msra.mxu0 0
    %156 = vmatprep.subr.bf16.mxu0 0
    %157 = vmatpush1.bf16.msra.mxu0 0
    %158 = vmatprep.subr.bf16.mxu0 0
    %159 = vmatpush1.bf16.msra.mxu0 0
    %160 = vmatprep.subr.bf16.mxu0 0
    %161 = vmatpush1.bf16.msra.mxu0 0
    %162 = vmatprep.subr.bf16.mxu0 0
    %163 = vmatpush1.bf16.msra.mxu0 0
    %164 = vmatprep.subr.bf16.mxu0 0
    %165 = vmatpush1.bf16.msra.mxu0 0
    %166 = vmatprep.mubr.bf16.mxu0 0
    %167 = vmatmul.mubr.bf16.gmra.mrb[0].mxu0 %v61
    %v168 = vpop.f32.mrb[0].mxu0
    %v169 = vadd.f32 %v84, %v168
    %v170 = vpop.f32.mrb[0].mxu0
    %v171 = vpop.f32.mrb[0].mxu0
    %v172 = vadd.f32 %v84, %v171
    %v173 = vpop.f32.mrb[0].mxu0
    %174 = vmatprep.mubr.bf16.mxu0 0
    %175 = vmatmul.mubr.bf16.gmra.mrb[0].mxu0 %v62
    %v176 = vpop.f32.mrb[0].mxu0
    %v177 = vadd.f32 %v84, %v176
    %v178 = vpop.f32.mrb[0].mxu0
    %v179 = vpop.f32.mrb[0].mxu0
    %v180 = vadd.f32 %v84, %v179
    %v181 = vpop.f32.mrb[0].mxu0
    %182 = vdwg.mxu0
    %v183 = vxor.u32 %v169, 2147483648
    %v184 = vxor.u32 %v172, 2147483648
    %v185 = vxor.u32 %v177, 2147483648
    %v186 = vxor.u32 %v180, 2147483648
    %v187 = vmul.f32 %v183, 1.442695
    %v188 = vpow.pop %v187
    %v189 = vmul.f32 %v184, 1.442695
    %v190 = vpow.pop %v189
    %v191 = vmul.f32 %v185, 1.442695
    %v192 = vpow.pop %v191
    %v193 = vmul.f32 %v186, 1.442695
    %v194 = vpow.pop %v193
    %v195 = vadd.f32 %v188, 1.0
    %v196 = vadd.f32 %v190, 1.0
    %v197 = vadd.f32 %v192, 1.0
    %v198 = vadd.f32 %v194, 1.0
    %v199 = vrcp.pop %v195
    %v200 = vmul.f32 1.0, %v199
    %v201 = vrcp.pop %v196
    %v202 = vmul.f32 1.0, %v201
    %v203 = vrcp.pop %v197
    %v204 = vmul.f32 1.0, %v203
    %v205 = vrcp.pop %v198
    %v206 = vmul.f32 1.0, %v205
    %v207 = vmul.f32 %v169, %v200
    %v208 = vmul.f32 %v172, %v202
    %v209 = vmul.f32 %v177, %v204
    %v210 = vmul.f32 %v180, %v206
    %v211 = vpack.c.bf16 %v208, %v207
    %v212 = vpack.c.bf16 %v210, %v209
    %v213 = vld [vmem:[%s4] sm:$0xf]
    %v214 = vld [vmem:[%s4 + $0x4] sm:$0xf]
    %v215 = vld [vmem:[%s4 + $0x8] sm:$0xf]
    %v216 = vld [vmem:[%s4 + $0xc] sm:$0xf]
    %v217 = vld [vmem:[%s4 + $0x10] sm:$0xf]
    %v218 = vld [vmem:[%s4 + $0x14] sm:$0xf]
    %v219 = vld [vmem:[%s4 + $0x18] sm:$0xf]
    %v220 = vld [vmem:[%s4 + $0x1c] sm:$0xf]
    %v221 = vld [vmem:[%s4 + $0x20] sm:$0xf]
    %v222 = vld [vmem:[%s4 + $0x24] sm:$0xf]
    %v223 = vld [vmem:[%s4 + $0x28] sm:$0xf]
    %v224 = vld [vmem:[%s4 + $0x2c] sm:$0xf]
    %v225 = vld [vmem:[%s4 + $0x30] sm:$0xf]
    %v226 = vld [vmem:[%s4 + $0x34] sm:$0xf]
    %v227 = vld [vmem:[%s4 + $0x38] sm:$0xf]
    %v228 = vld [vmem:[%s4 + $0x3c] sm:$0xf]
    %v229 = vld [vmem:[%s5] sm:$0x1]
    %v231 = vlaneseq
    %v232 = vshrl.u32 %v231, 7
    %v233 = vsub.s32 0, %v232
    %v234 = vrot.slane %v229, %v233
    %v252 = vunpack.c.l.b16 %v213
    %v253 = vunpack.c.l.b16 %v214
    %v254 = vunpack.c.l.b16 %v215
    %v255 = vunpack.c.l.b16 %v216
    %v256 = vunpack.c.l.b16 %v217
    %v257 = vunpack.c.l.b16 %v218
    %v258 = vunpack.c.l.b16 %v219
    %v259 = vunpack.c.l.b16 %v220
    %v260 = vunpack.c.l.b16 %v221
    %v261 = vunpack.c.l.b16 %v222
    %v262 = vunpack.c.l.b16 %v223
    %v263 = vunpack.c.l.b16 %v224
    %v264 = vunpack.c.l.b16 %v225
    %v265 = vunpack.c.l.b16 %v226
    %v266 = vunpack.c.l.b16 %v227
    %v267 = vunpack.c.l.b16 %v228
    %v268 = vpack.c.b16 %v253, %v252
    %v269 = vpack.c.b16 %v255, %v254
    %v270 = vpack.c.b16 %v257, %v256
    %v271 = vpack.c.b16 %v259, %v258
    %v272 = vpack.c.b16 %v261, %v260
    %v273 = vpack.c.b16 %v263, %v262
    %v274 = vpack.c.b16 %v265, %v264
    %v275 = vpack.c.b16 %v267, %v266
    %284 = vmatprep.subr.bf16.mxu0 0
    %285 = vmatpush1.bf16.msra.mxu0 %v268
    %286 = vmatprep.subr.bf16.mxu0 0
    %287 = vmatpush1.bf16.msra.mxu0 %v269
    %288 = vmatprep.subr.bf16.mxu0 0
    %289 = vmatpush1.bf16.msra.mxu0 %v270
    %290 = vmatprep.subr.bf16.mxu0 0
    %291 = vmatpush1.bf16.msra.mxu0 %v271
    %292 = vmatprep.subr.bf16.mxu0 0
    %293 = vmatpush1.bf16.msra.mxu0 %v272
    %294 = vmatprep.subr.bf16.mxu0 0
    %295 = vmatpush1.bf16.msra.mxu0 %v273
    %296 = vmatprep.subr.bf16.mxu0 0
    %297 = vmatpush1.bf16.msra.mxu0 %v274
    %298 = vmatprep.subr.bf16.mxu0 0
    %299 = vmatpush1.bf16.msra.mxu0 %v275
    %300 = vmatprep.subr.bf16.mxu0 0
    %301 = vmatpush1.bf16.msra.mxu0 0
    %302 = vmatprep.subr.bf16.mxu0 0
    %303 = vmatpush1.bf16.msra.mxu0 0
    %304 = vmatprep.subr.bf16.mxu0 0
    %305 = vmatpush1.bf16.msra.mxu0 0
    %306 = vmatprep.subr.bf16.mxu0 0
    %307 = vmatpush1.bf16.msra.mxu0 0
    %308 = vmatprep.subr.bf16.mxu0 0
    %309 = vmatpush1.bf16.msra.mxu0 0
    %310 = vmatprep.subr.bf16.mxu0 0
    %311 = vmatpush1.bf16.msra.mxu0 0
    %312 = vmatprep.subr.bf16.mxu0 0
    %313 = vmatpush1.bf16.msra.mxu0 0
    %314 = vmatprep.subr.bf16.mxu0 0
    %315 = vmatpush1.bf16.msra.mxu0 0
    %316 = vmatprep.mubr.bf16.mxu0 0
    %317 = vmatmul.mubr.bf16.gmra.mrb[0].mxu0 %v211
    %v318 = vpop.f32.mrb[0].mxu0
    %v319 = vadd.f32 %v234, %v318
    %v320 = vpop.f32.mrb[0].mxu0
    %v321 = vpop.f32.mrb[0].mxu0
    %v322 = vadd.f32 %v234, %v321
    %v323 = vpop.f32.mrb[0].mxu0
    %324 = vmatprep.mubr.bf16.mxu0 0
    %325 = vmatmul.mubr.bf16.gmra.mrb[0].mxu0 %v212
    %v326 = vpop.f32.mrb[0].mxu0
    %v327 = vadd.f32 %v234, %v326
    %v328 = vpop.f32.mrb[0].mxu0
    %v329 = vpop.f32.mrb[0].mxu0
    %v330 = vadd.f32 %v234, %v329
    %v331 = vpop.f32.mrb[0].mxu0
    %332 = vdwg.mxu0
    %v333 = vxor.u32 %v319, 2147483648
    %v334 = vxor.u32 %v322, 2147483648
    %v335 = vxor.u32 %v327, 2147483648
    %v336 = vxor.u32 %v330, 2147483648
    %v337 = vmul.f32 %v333, 1.442695
    %v338 = vpow.pop %v337
    %v339 = vmul.f32 %v334, 1.442695
    %v340 = vpow.pop %v339
    %v341 = vmul.f32 %v335, 1.442695
    %v342 = vpow.pop %v341
    %v343 = vmul.f32 %v336, 1.442695
    %v344 = vpow.pop %v343
    %v345 = vadd.f32 %v338, 1.0
    %v346 = vadd.f32 %v340, 1.0
    %v347 = vadd.f32 %v342, 1.0
    %v348 = vadd.f32 %v344, 1.0
    %v349 = vrcp.pop %v345
    %v350 = vmul.f32 1.0, %v349
    %v351 = vrcp.pop %v346
    %v352 = vmul.f32 1.0, %v351
    %v353 = vrcp.pop %v347
    %v354 = vmul.f32 1.0, %v353
    %v355 = vrcp.pop %v348
    %v356 = vmul.f32 1.0, %v355
    %v357 = vmul.f32 %v319, %v350
    %v358 = vmul.f32 %v322, %v352
    %v359 = vmul.f32 %v327, %v354
    %v360 = vmul.f32 %v330, %v356
    %v361 = vpack.c.bf16 %v358, %v357
    %v362 = vpack.c.bf16 %v360, %v359
    %v363 = vld [vmem:[%s6] sm:$0xf]
    %v364 = vld [vmem:[%s6 + $0x4] sm:$0xf]
    %v365 = vld [vmem:[%s6 + $0x8] sm:$0xf]
    %v366 = vld [vmem:[%s6 + $0xc] sm:$0xf]
    %v367 = vld [vmem:[%s6 + $0x10] sm:$0xf]
    %v368 = vld [vmem:[%s6 + $0x14] sm:$0xf]
    %v369 = vld [vmem:[%s6 + $0x18] sm:$0xf]
    %v370 = vld [vmem:[%s6 + $0x1c] sm:$0xf]
    %v371 = vld [vmem:[%s6 + $0x20] sm:$0xf]
    %v372 = vld [vmem:[%s6 + $0x24] sm:$0xf]
    %v373 = vld [vmem:[%s6 + $0x28] sm:$0xf]
    %v374 = vld [vmem:[%s6 + $0x2c] sm:$0xf]
    %v375 = vld [vmem:[%s6 + $0x30] sm:$0xf]
    %v376 = vld [vmem:[%s6 + $0x34] sm:$0xf]
    %v377 = vld [vmem:[%s6 + $0x38] sm:$0xf]
    %v378 = vld [vmem:[%s6 + $0x3c] sm:$0xf]
    %v379 = vld [vmem:[%s7] sm:$0x1]
    %v381 = vlaneseq
    %v382 = vshrl.u32 %v381, 7
    %v383 = vsub.s32 0, %v382
    %v384 = vrot.slane %v379, %v383
    %v402 = vunpack.c.l.b16 %v363
    %v403 = vunpack.c.l.b16 %v364
    %v404 = vunpack.c.l.b16 %v365
    %v405 = vunpack.c.l.b16 %v366
    %v406 = vunpack.c.l.b16 %v367
    %v407 = vunpack.c.l.b16 %v368
    %v408 = vunpack.c.l.b16 %v369
    %v409 = vunpack.c.l.b16 %v370
    %v410 = vunpack.c.l.b16 %v371
    %v411 = vunpack.c.l.b16 %v372
    %v412 = vunpack.c.l.b16 %v373
    %v413 = vunpack.c.l.b16 %v374
    %v414 = vunpack.c.l.b16 %v375
    %v415 = vunpack.c.l.b16 %v376
    %v416 = vunpack.c.l.b16 %v377
    %v417 = vunpack.c.l.b16 %v378
    %v418 = vpack.c.b16 %v403, %v402
    %v419 = vpack.c.b16 %v405, %v404
    %v420 = vpack.c.b16 %v407, %v406
    %v421 = vpack.c.b16 %v409, %v408
    %v422 = vpack.c.b16 %v411, %v410
    %v423 = vpack.c.b16 %v413, %v412
    %v424 = vpack.c.b16 %v415, %v414
    %v425 = vpack.c.b16 %v417, %v416
    %434 = vmatprep.subr.bf16.mxu0 0
    %435 = vmatpush1.bf16.msra.mxu0 %v418
    %436 = vmatprep.subr.bf16.mxu0 0
    %437 = vmatpush1.bf16.msra.mxu0 %v419
    %438 = vmatprep.subr.bf16.mxu0 0
    %439 = vmatpush1.bf16.msra.mxu0 %v420
    %440 = vmatprep.subr.bf16.mxu0 0
    %441 = vmatpush1.bf16.msra.mxu0 %v421
    %442 = vmatprep.subr.bf16.mxu0 0
    %443 = vmatpush1.bf16.msra.mxu0 %v422
    %444 = vmatprep.subr.bf16.mxu0 0
    %445 = vmatpush1.bf16.msra.mxu0 %v423
    %446 = vmatprep.subr.bf16.mxu0 0
    %447 = vmatpush1.bf16.msra.mxu0 %v424
    %448 = vmatprep.subr.bf16.mxu0 0
    %449 = vmatpush1.bf16.msra.mxu0 %v425
    %450 = vmatprep.subr.bf16.mxu0 0
    %451 = vmatpush1.bf16.msra.mxu0 0
    %452 = vmatprep.subr.bf16.mxu0 0
    %453 = vmatpush1.bf16.msra.mxu0 0
    %454 = vmatprep.subr.bf16.mxu0 0
    %455 = vmatpush1.bf16.msra.mxu0 0
    %456 = vmatprep.subr.bf16.mxu0 0
    %457 = vmatpush1.bf16.msra.mxu0 0
    %458 = vmatprep.subr.bf16.mxu0 0
    %459 = vmatpush1.bf16.msra.mxu0 0
    %460 = vmatprep.subr.bf16.mxu0 0
    %461 = vmatpush1.bf16.msra.mxu0 0
    %462 = vmatprep.subr.bf16.mxu0 0
    %463 = vmatpush1.bf16.msra.mxu0 0
    %464 = vmatprep.subr.bf16.mxu0 0
    %465 = vmatpush1.bf16.msra.mxu0 0
    %466 = vmatprep.mubr.bf16.mxu0 0
    %467 = vmatmul.mubr.bf16.gmra.mrb[0].mxu0 %v361
    %v468 = vpop.f32.mrb[0].mxu0
    %v469 = vadd.f32 %v384, %v468
    %v470 = vpop.f32.mrb[0].mxu0
    %v471 = vpop.f32.mrb[0].mxu0
    %v472 = vadd.f32 %v384, %v471
    %v473 = vpop.f32.mrb[0].mxu0
    %474 = vmatprep.mubr.bf16.mxu0 0
    %475 = vmatmul.mubr.bf16.gmra.mrb[0].mxu0 %v362
    %v476 = vpop.f32.mrb[0].mxu0
    %v477 = vadd.f32 %v384, %v476
    %v478 = vpop.f32.mrb[0].mxu0
    %v479 = vpop.f32.mrb[0].mxu0
    %v480 = vadd.f32 %v384, %v479
    %v481 = vpop.f32.mrb[0].mxu0
    %482 = vdwg.mxu0
    %484 = vset.pattern.permute.xlu0 64
    %485 = vperm.xlu0 %484, %v350
    %v486 = vpop.permute.xlu0 %485
    %489 = vset.pattern.permute.xlu0 64
    %490 = vperm.xlu0 %489, %v352
    %v491 = vpop.permute.xlu0 %490
    %494 = vset.pattern.permute.xlu0 64
    %495 = vperm.xlu0 %494, %v354
    %v496 = vpop.permute.xlu0 %495
    %499 = vset.pattern.permute.xlu0 64
    %500 = vperm.xlu0 %499, %v356
    %v501 = vpop.permute.xlu0 %500
    %v503 = vmul.f32 %v486, %v469
    %v504 = vmul.f32 %v491, %v472
    %v505 = vmul.f32 %v496, %v477
    %v506 = vmul.f32 %v501, %v480
    %v507 = vld [vmem:[%s0] sm:$0x1]
    %v508 = vlaneseq
    %v509 = vshrl.u32 %v508, 7
    %v510 = vlaneseq
    %v511 = vshrl.u32 %v510, 7
    %v512 = vsub.s32 0, %v511
    %v513 = vrot.slane %v507, %v512
    %vm514 = vcmp.eq.s32.totalorder %v509, %v513
    %v515 = vsel %vm514, 1, 0
    %v516 = vcvt.s32.f32 %v515
    %v517 = vpack.c.bf16 %v516, %v516
    %v518 = vld [vmem:[#allocation3] sm:$0xf]
    %v519 = vpack.c.bf16 %v504, %v503
    %v520 = vpack.c.bf16 %v506, %v505
    %vm521 = vcmask 261120
    %v523 = vsel %vm521, %v517, 0
    %525 = vmatprep.subr.bf16.mxu0 0
    %526 = vmatpush1.bf16.msra.mxu0 %v519
    %527 = vmatprep.subr.bf16.mxu0 0
    %528 = vmatpush1.bf16.msra.mxu0 %v520
    %529 = vmatprep.subr.bf16.mxu0 0
    %530 = vmatpush1.bf16.msra.mxu0 0
    %531 = vmatprep.subr.bf16.mxu0 0
    %532 = vmatpush1.bf16.msra.mxu0 0
    %533 = vmatprep.subr.bf16.mxu0 0
    %534 = vmatpush1.bf16.msra.mxu0 0
    %535 = vmatprep.subr.bf16.mxu0 0
    %536 = vmatpush1.bf16.msra.mxu0 0
    %537 = vmatprep.subr.bf16.mxu0 0
    %538 = vmatpush1.bf16.msra.mxu0 0
    %539 = vmatprep.subr.bf16.mxu0 0
    %540 = vmatpush1.bf16.msra.mxu0 0
    %541 = vmatprep.subr.bf16.mxu0 0
    %542 = vmatpush1.bf16.msra.mxu0 0
    %543 = vmatprep.subr.bf16.mxu0 0
    %544 = vmatpush1.bf16.msra.mxu0 0
    %545 = vmatprep.subr.bf16.mxu0 0
    %546 = vmatpush1.bf16.msra.mxu0 0
    %547 = vmatprep.subr.bf16.mxu0 0
    %548 = vmatpush1.bf16.msra.mxu0 0
    %549 = vmatprep.subr.bf16.mxu0 0
    %550 = vmatpush1.bf16.msra.mxu0 0
    %551 = vmatprep.subr.bf16.mxu0 0
    %552 = vmatpush1.bf16.msra.mxu0 0
    %553 = vmatprep.subr.bf16.mxu0 0
    %554 = vmatpush1.bf16.msra.mxu0 0
    %555 = vmatprep.subr.bf16.mxu0 0
    %556 = vmatpush1.bf16.msra.mxu0 0
    %557 = vmatprep.mubr.bf16.mxu0 0
    %558 = vmatmul.mubr.bf16.gmra.mrb[0].mxu0 %v523
    %v559 = vpop.f32.mrb[0].mxu0
    %v560 = vadd.f32 0.0, %v559
    %v561 = vpop.f32.mrb[0].mxu0
    %v562 = vpop.f32.mrb[0].mxu0
    %v563 = vpop.f32.mrb[0].mxu0
    %564 = vdwg.mxu0
    %v565 = vadd.f32 %v518, %v560
    %566 = vst [vmem:[#allocation3] sm:$0xf] %v565
    // Predicated region
    $region58: #{tpu_custom_call.1} parent=1 // pred_check
      %p567 = pneg %p50
    $region59: #{tpu_custom_call.1} parent=1 // pred_check_branch
      %569 = sbr.rel (%p567) target = $region61
    $region60: #{tpu_custom_call.1} parent=1 // pred_region
      %v570 = vld [vmem:[#allocation3] sm:$0xf]
      %v571 = vld [vmem:[%s8] sm:$0xf]
      %573 = vset.pattern.permute.xlu0 0
      %574 = vperm.xlu0 %573, %v571
      %v575 = vpop.permute.xlu0 %574
      %v577 = vmul.f32 %v570, %v575
      %578 = vst [vmem:[#allocation3] sm:$0xf] %v577
      %v579 = vld [vmem:[%s9] sm:$0xff]
      %v580 = vld [vmem:[%s9 + $0x8] sm:$0xff]
      %v581 = vld [vmem:[%s9 + $0x10] sm:$0xff]
      %v582 = vld [vmem:[%s9 + $0x18] sm:$0xff]
      %v583 = vld [vmem:[%s9 + $0x20] sm:$0xff]
      %v584 = vld [vmem:[%s9 + $0x28] sm:$0xff]
      %v585 = vld [vmem:[%s9 + $0x30] sm:$0xff]
      %v586 = vld [vmem:[%s9 + $0x38] sm:$0xff]
      %v587 = vld [vmem:[%s9 + $0x40] sm:$0xff]
      %v588 = vld [vmem:[%s9 + $0x48] sm:$0xff]
      %v589 = vld [vmem:[%s9 + $0x50] sm:$0xff]
      %v590 = vld [vmem:[%s9 + $0x58] sm:$0xff]
      %v591 = vld [vmem:[%s9 + $0x60] sm:$0xff]
      %v592 = vld [vmem:[%s9 + $0x68] sm:$0xff]
      %v593 = vld [vmem:[%s9 + $0x70] sm:$0xff]
      %v594 = vld [vmem:[%s9 + $0x78] sm:$0xff]
      %v595 = vld [vmem:[%s10] sm:$0x1]
      %v597 = vlaneseq
      %v598 = vshrl.u32 %v597, 7
      %v599 = vsub.s32 0, %v598
      %v600 = vrot.slane %v595, %v599
      %602 = vmatprep.subr.mxu0 0.0
      %603 = vmatpush1.msra.mxu0 %v579
      %604 = vmatprep.subr.mxu0 0.0
      %605 = vmatpush1.msra.mxu0 %v580
      %606 = vmatprep.subr.mxu0 0.0
      %607 = vmatpush1.msra.mxu0 %v581
      %608 = vmatprep.subr.mxu0 0.0
      %609 = vmatpush1.msra.mxu0 %v582
      %610 = vmatprep.subr.mxu0 0.0
      %611 = vmatpush1.msra.mxu0 %v583
      %612 = vmatprep.subr.mxu0 0.0
      %613 = vmatpush1.msra.mxu0 %v584
      %614 = vmatprep.subr.mxu0 0.0
      %615 = vmatpush1.msra.mxu0 %v585
      %616 = vmatprep.subr.mxu0 0.0
      %617 = vmatpush1.msra.mxu0 %v586
      %618 = vmatprep.subr.mxu0 0.0
      %619 = vmatpush1.msra.mxu0 %v587
      %620 = vmatprep.subr.mxu0 0.0
      %621 = vmatpush1.msra.mxu0 %v588
      %622 = vmatprep.subr.mxu0 0.0
      %623 = vmatpush1.msra.mxu0 %v589
      %624 = vmatprep.subr.mxu0 0.0
      %625 = vmatpush1.msra.mxu0 %v590
      %626 = vmatprep.subr.mxu0 0.0
      %627 = vmatpush1.msra.mxu0 %v591
      %628 = vmatprep.subr.mxu0 0.0
      %629 = vmatpush1.msra.mxu0 %v592
      %630 = vmatprep.subr.mxu0 0.0
      %631 = vmatpush1.msra.mxu0 %v593
      %632 = vmatprep.subr.mxu0 0.0
      %633 = vmatpush1.msra.mxu0 %v594
      %634 = vmatprep.subr.mxu0 0.0
      %635 = vmatpush1.msra.mxu0 0.0
      %636 = vmatprep.subr.mxu0 0.0
      %637 = vmatpush1.msra.mxu0 0.0
      %638 = vmatprep.subr.mxu0 0.0
      %639 = vmatpush1.msra.mxu0 0.0
      %640 = vmatprep.subr.mxu0 0.0
      %641 = vmatpush1.msra.mxu0 0.0
      %642 = vmatprep.subr.mxu0 0.0
      %643 = vmatpush1.msra.mxu0 0.0
      %644 = vmatprep.subr.mxu0 0.0
      %645 = vmatpush1.msra.mxu0 0.0
      %646 = vmatprep.subr.mxu0 0.0
      %647 = vmatpush1.msra.mxu0 0.0
      %648 = vmatprep.subr.mxu0 0.0
      %649 = vmatpush1.msra.mxu0 0.0
      %650 = vmatprep.subr.mxu0 0.0
      %651 = vmatpush1.msra.mxu0 0.0
      %652 = vmatprep.subr.mxu0 0.0
      %653 = vmatpush1.msra.mxu0 0.0
      %654 = vmatprep.subr.mxu0 0.0
      %655 = vmatpush1.msra.mxu0 0.0
      %656 = vmatprep.subr.mxu0 0.0
      %657 = vmatpush1.msra.mxu0 0.0
      %658 = vmatprep.subr.mxu0 0.0
      %659 = vmatpush1.msra.mxu0 0.0
      %660 = vmatprep.subr.mxu0 0.0
      %661 = vmatpush1.msra.mxu0 0.0
      %662 = vmatprep.subr.mxu0 0.0
      %663 = vmatpush1.msra.mxu0 0.0
      %664 = vmatprep.subr.mxu0 0.0
      %665 = vmatpush1.msra.mxu0 0.0
      %666 = vmatprep.mubr.f32.mxu0 0.0
      %667 = vmatmul.mubr.f32.gmra.mrb[0].mxu0 %v577
      %v668 = vpop.f32.mrb[0].mxu0
      %v669 = vadd.f32 %v600, %v668
      %v670 = vpop.f32.mrb[0].mxu0
      %671 = vdwg.mxu0
      %v672 = vld [vmem:[%s11] sm:$0xff]
      %v673 = vld [vmem:[%s11 + $0x8] sm:$0xff]
      %v674 = vld [vmem:[%s11 + $0x10] sm:$0xff]
      %v675 = vld [vmem:[%s11 + $0x18] sm:$0xff]
      %v676 = vld [vmem:[%s11 + $0x20] sm:$0xff]
      %v677 = vld [vmem:[%s11 + $0x28] sm:$0xff]
      %v678 = vld [vmem:[%s11 + $0x30] sm:$0xff]
      %v679 = vld [vmem:[%s11 + $0x38] sm:$0xff]
      %v680 = vld [vmem:[#allocation2] sm:$0x1]
      %v682 = vlaneseq
      %v683 = vshrl.u32 %v682, 7
      %v684 = vsub.s32 0, %v683
      %v685 = vrot.slane %v680, %v684
      %vm687 = vcmask 523264
      %v689 = vsel %vm687, %v669, 0
      %691 = vmatprep.subr.mxu0 0.0
      %692 = vmatpush1.msra.mxu0 %v672
      %693 = vmatprep.subr.mxu0 0.0
      %694 = vmatpush1.msra.mxu0 %v673
      %695 = vmatprep.subr.mxu0 0.0
      %696 = vmatpush1.msra.mxu0 %v674
      %697 = vmatprep.subr.mxu0 0.0
      %698 = vmatpush1.msra.mxu0 %v675
      %699 = vmatprep.subr.mxu0 0.0
      %700 = vmatpush1.msra.mxu0 %v676
      %701 = vmatprep.subr.mxu0 0.0
      %702 = vmatpush1.msra.mxu0 %v677
      %703 = vmatprep.subr.mxu0 0.0
      %704 = vmatpush1.msra.mxu0 %v678
      %705 = vmatprep.subr.mxu0 0.0
      %706 = vmatpush1.msra.mxu0 %v679
      %707 = vmatprep.subr.mxu0 0.0
      %708 = vmatpush1.msra.mxu0 0.0
      %709 = vmatprep.subr.mxu0 0.0
      %710 = vmatpush1.msra.mxu0 0.0
      %711 = vmatprep.subr.mxu0 0.0
      %712 = vmatpush1.msra.mxu0 0.0
      %713 = vmatprep.subr.mxu0 0.0
      %714 = vmatpush1.msra.mxu0 0.0
      %715 = vmatprep.subr.mxu0 0.0
      %716 = vmatpush1.msra.mxu0 0.0
      %717 = vmatprep.subr.mxu0 0.0
      %718 = vmatpush1.msra.mxu0 0.0
      %719 = vmatprep.subr.mxu0 0.0
      %720 = vmatpush1.msra.mxu0 0.0
      %721 = vmatprep.subr.mxu0 0.0
      %722 = vmatpush1.msra.mxu0 0.0
      %723 = vmatprep.subr.mxu0 0.0
      %724 = vmatpush1.msra.mxu0 0.0
      %725 = vmatprep.subr.mxu0 0.0
      %726 = vmatpush1.msra.mxu0 0.0
      %727 = vmatprep.subr.mxu0 0.0
      %728 = vmatpush1.msra.mxu0 0.0
      %729 = vmatprep.subr.mxu0 0.0
      %730 = vmatpush1.msra.mxu0 0.0
      %731 = vmatprep.subr.mxu0 0.0
      %732 = vmatpush1.msra.mxu0 0.0
      %733 = vmatprep.subr.mxu0 0.0
      %734 = vmatpush1.msra.mxu0 0.0
      %735 = vmatprep.subr.mxu0 0.0
      %736 = vmatpush1.msra.mxu0 0.0
      %737 = vmatprep.subr.mxu0 0.0
      %738 = vmatpush1.msra.mxu0 0.0
      %739 = vmatprep.subr.mxu0 0.0
      %740 = vmatpush1.msra.mxu0 0.0
      %741 = vmatprep.subr.mxu0 0.0
      %742 = vmatpush1.msra.mxu0 0.0
      %743 = vmatprep.subr.mxu0 0.0
      %744 = vmatpush1.msra.mxu0 0.0
      %745 = vmatprep.subr.mxu0 0.0
      %746 = vmatpush1.msra.mxu0 0.0
      %747 = vmatprep.subr.mxu0 0.0
      %748 = vmatpush1.msra.mxu0 0.0
      %749 = vmatprep.subr.mxu0 0.0
      %750 = vmatpush1.msra.mxu0 0.0
      %751 = vmatprep.subr.mxu0 0.0
      %752 = vmatpush1.msra.mxu0 0.0
      %753 = vmatprep.subr.mxu0 0.0
      %754 = vmatpush1.msra.mxu0 0.0
      %755 = vmatprep.mubr.f32.mxu0 0.0
      %756 = vmatmul.mubr.f32.gmra.mrb[0].mxu0 %v689
      %v757 = vpop.f32.mrb[0].mxu0
      %v758 = vadd.f32 %v685, %v757
      %v759 = vpop.f32.mrb[0].mxu0
      %760 = vdwg.mxu0
      %vm761 = vcmask 3072
      %762 = vst.msk [vmem:[%s13] sm:$0xf] %vm761, %v758
    $region61: #{tpu_custom_call.1} parent=1 // pred_fallthru
      _
    // Predicated region
    $region62: #{tpu_custom_call.1} parent=1 // pred_check
      _
    $region63: #{tpu_custom_call.1} parent=1 // pred_check_branch
      %764 = sbr.rel (0) target = $region65
    $region64: #{tpu_custom_call.1} parent=1 // pred_region
      _
    $region65: #{tpu_custom_call.1} parent=1 // pred_fallthru
      _
    // Predicated region
    $region66: #{tpu_custom_call.1} parent=1 // pred_check
      _
    $region67: #{tpu_custom_call.1} parent=1 // pred_check_branch
      %766 = sbr.rel (0) target = $region69
    $region68: #{tpu_custom_call.1} parent=1 // pred_region
      %s768 = ssub.s32 64, 64
      %769 = vsyncadd [#allocation4], %s768
      %s771 = sshll.u32 [#allocation3], 4
      %s772 = int_to_ptr.vmem [resolvable:$true] %s771
      %774 = dma.vmem_to_hbm [thread:$0]  %s772, 64, %s14, [#allocation4]
    $region69: #{tpu_custom_call.1} parent=1 // pred_fallthru
      _
    // Predicated region
    $region70: #{tpu_custom_call.1} parent=1 // pred_check
      _
    $region71: #{tpu_custom_call.1} parent=1 // pred_check_branch
      %776 = sbr.rel (0) target = $region73
    $region72: #{tpu_custom_call.1} parent=1 // pred_region
      _
    $region73: #{tpu_custom_call.1} parent=1 // pred_fallthru
      _
    // Predicated region
    $region74: #{tpu_custom_call.1} parent=1 // pred_check
      _
    $region75: #{tpu_custom_call.1} parent=1 // pred_check_branch
      %778 = sbr.rel (0) target = $region77
    $region76: #{tpu_custom_call.1} parent=1 // pred_region
      %779 = dma.done [#allocation4], 64
    $region77: #{tpu_custom_call.1} parent=1 // pred_fallthru
      _
    %780 = vsyncpa [#allocation4], 1

</llo_original>
